<compile_context>
chip_gen: v5e
topology: v5e:2x2
jax: 0.10.0
libtpu: 0.0.40
codegen_flags: <defaults>
</compile_context>

<pallas_src>
import jax
import jax.numpy as jnp
from jax import lax
from jax.experimental import pallas as pl
from jax.experimental.pallas import tpu as pltpu


def _disparity_regression_kernel(x_ref, o_ref):
    # x_ref: (D, tH, tW) probability-volume tile for one batch element.
    # o_ref: (tH, tW)    regressed disparity tile.
    x = x_ref[...].astype(jnp.float32)
    # disp[d, :, :] == d / 3, computed in-kernel (no constant input DMA).
    disp = lax.broadcasted_iota(jnp.int32, x.shape, 0).astype(jnp.float32) * (1.0 / 3.0)
    o_ref[...] = jnp.sum(x * disp, axis=0).astype(o_ref.dtype)


def _choose_tiles(D, H, W, in_itemsize, out_itemsize,
                  vmem_budget_bytes=18 * 1024 * 1024):
    """Pick lane-dense (tH, tW) tiles that keep the double-buffered pipeline in VMEM.

    Budget per H-row of a tile of width tw:
      2x double-buffered native-dtype input + ~3 full-size f32 compute temporaries
      (upcast, iota, product) + double-buffered output rows.
    """
    def row_bytes(tw):
        return D * tw * (2 * in_itemsize + 3 * 4) + 2 * tw * out_itemsize

    # W tile: multiple of 128 (unmasked lane-dense stores) when W allows,
    # otherwise the full width (which also satisfies the (8,128) rule).
    if W > 128:
        tW = min(512, (W // 128) * 128)
        while tW > 128 and 8 * row_bytes(tW) > vmem_budget_bytes:
            tW -= 128
    else:
        tW = W

    # H tile: multiple of 8 (or full H), as tall as the budget allows (cap 256).
    max_tH = int(vmem_budget_bytes // row_bytes(tW))
    if H <= max_tH:
        tH = H
    else:
        tH = max(8, (min(max_tH, 256) // 8) * 8)
    return tH, tW


def disparity_regression_sub3(x, maxdisp):
    """x: [B, maxdisp*3, H, W]  ->  [B, H, W]; out[b,h,w] = sum_d x[b,d,h,w] * d/3."""
    B, D, H, W = x.shape
    assert D == maxdisp * 3, "channel dim must equal maxdisp * 3"

    out_dtype = x.dtype
    tH, tW = _choose_tiles(D, H, W, x.dtype.itemsize, jnp.dtype(out_dtype).itemsize)
    grid = (B, pl.cdiv(H, tH), pl.cdiv(W, tW))

    return pl.pallas_call(
        _disparity_regression_kernel,
        out_shape=jax.ShapeDtypeStruct((B, H, W), out_dtype),
        grid=grid,
        in_specs=[
            # One (D, tH, tW) tile per grid step; batch dim squeezed away in-kernel.
            pl.BlockSpec((pl.Squeezed(), D, tH, tW),
                         lambda b, hi, wi: (b, 0, hi, wi)),
        ],
        out_specs=pl.BlockSpec((pl.Squeezed(), tH, tW),
                               lambda b, hi, wi: (b, hi, wi)),
        compiler_params=pltpu.CompilerParams(
            dimension_semantics=("parallel", "parallel", "parallel"),
            vmem_limit_bytes=32 * 1024 * 1024,
        ),
    )(x)


if __name__ == "__main__":
    key = jax.random.PRNGKey(0)
    B, maxdisp, H, W = 2, 4, 16, 16          # D = maxdisp*3 = 12
    D = maxdisp * 3

    # Synthetic probability-like volume (softmax over the disparity axis, as the
    # upstream network would produce), deterministic from PRNGKey(0).
    logits = jax.random.normal(key, (B, D, H, W), dtype=jnp.float32)
    x = jax.nn.softmax(logits, axis=1)

    out = disparity_regression_sub3(x, maxdisp)
    out = jax.block_until_ready(out)

    # Pure-JAX reference mirroring the PyTorch forward.
    disp_ref = (jnp.arange(D, dtype=jnp.float32) / 3.0).reshape(1, D, 1, 1)
    ref = jnp.sum(x * disp_ref, axis=1)

    assert out.shape == (B, H, W)
    assert jnp.allclose(out, ref, atol=1e-5, rtol=1e-5)
    print("KERNEL_OK")
</pallas_src>

<mosaic_0001>
module attributes {stable_mosaic.version = 11 : i64} {
  func.func @_disparity_regression_kernel(%arg0: i32, %arg1: i32, %arg2: i32, %arg3: memref<1x12x16x16xf32, #tpu.memory_space<vmem>>, %arg4: memref<1x16x16xf32, #tpu.memory_space<vmem>>) attributes {dimension_semantics = [#tpu.dimension_semantics<parallel>, #tpu.dimension_semantics<parallel>, #tpu.dimension_semantics<parallel>], iteration_bounds = array<i64: 2, 1, 1>, scalar_prefetch = 0 : i64, scratch_operands = 0 : i64, tpu.core_type = #tpu.core_type<tc>, window_params = [{transform_indices = @transform_0, window_bounds = array<i64: 1, 12, 16, 16>}, {transform_indices = @transform_1, window_bounds = array<i64: 1, 16, 16>}]} {
    %c0 = arith.constant 0 : index
    %c0_0 = arith.constant 0 : index
    %c0_1 = arith.constant 0 : index
    %c0_2 = arith.constant 0 : index
    %0 = vector.load %arg3[%c0, %c0_0, %c0_1, %c0_2] : memref<1x12x16x16xf32, #tpu.memory_space<vmem>>, vector<1x12x16x16xf32>
    %1 = vector.shape_cast %0 : vector<1x12x16x16xf32> to vector<12x16x16xf32>
    %2 = tpu.iota {dimensions = array<i32: 0>} : vector<12x16x16xi32>
    %3 = arith.sitofp %2 : vector<12x16x16xi32> to vector<12x16x16xf32>
    %cst = arith.constant 0.333333343 : f32
    %4 = vector.broadcast %cst : f32 to vector<12x16x16xf32>
    %5 = arith.mulf %3, %4 : vector<12x16x16xf32>
    %6 = arith.mulf %1, %5 : vector<12x16x16xf32>
    %cst_3 = arith.constant dense<0.000000e+00> : vector<16x16xf32>
    %7 = vector.multi_reduction <add>, %6, %cst_3 [0] : vector<12x16x16xf32> to vector<16x16xf32>
    %c0_4 = arith.constant 0 : index
    %c0_5 = arith.constant 0 : index
    %c0_6 = arith.constant 0 : index
    %8 = vector.load %arg4[%c0_4, %c0_5, %c0_6] : memref<1x16x16xf32, #tpu.memory_space<vmem>>, vector<1x16x16xf32>
    %9 = vector.shape_cast %8 : vector<1x16x16xf32> to vector<16x16xf32>
    %10 = vector.shape_cast %7 : vector<16x16xf32> to vector<1x16x16xf32>
    tpu.vector_store %arg4[%c0_4, %c0_5, %c0_6], %10 {strides = array<i32>} : memref<1x16x16xf32, #tpu.memory_space<vmem>>, vector<1x16x16xf32>,
    return
  }
  func.func @transform_0(%arg0: i32, %arg1: i32, %arg2: i32) -> (i32, i32, i32, i32) {
    %c0_i32 = arith.constant 0 : i32
    %c0_i32_0 = arith.constant 0 : i32
    return %arg0, %c0_i32, %arg1, %arg2 : i32, i32, i32, i32
  }
  func.func @transform_1(%arg0: i32, %arg1: i32, %arg2: i32) -> (i32, i32, i32) {
    %c0_i32 = arith.constant 0 : i32
    return %arg0, %arg1, %arg2 : i32, i32, i32
  }
}

</mosaic_0001>

<llo_original>
// kernel: tpu_custom_call.1
$region0: #{tpu_custom_call.1}
  #allocation0 [shape = 'u32[]', space=smem, size = 0x4, offset = 0x4, fixed_abs, tag = 'smem constant byte address 0x4 - core index']
  #allocation1 [shape = 'u32[72,128]{1,0:T(1,128)}', space=vmem, size = 0x9000, scoped, tag = 'internal scratch']
  %s0 = inlined_call_operand.hbm [shape: f32[2,12,16,16], index: 0, kind: input, shape index: {}]
  %s1 = inlined_call_operand.hbm [shape: f32[2,16,16], index: 1, kind: output, shape index: {}]
  %s2 = sld [smem:[#allocation0]]
  $region41: #{tpu_custom_call.1} parent=0
    _
  %s4 = ssub.s32 1, %s2
  %s5 = scalar_select 0, %s4, %s2
  $region1: #{tpu_custom_call.1} parent=0
    #allocation2 [shape = 'u8[196608]{0}', space=vmem, size = 0x30000, scoped, tag = 'input window, operand 0']
    #allocation3 [shape = 's32[2]{0}', space=sflag, size = 0x8, scoped, tag = 'scoped memory for tpu_custom_call.1']
    #allocation4 [shape = 's32[2]{0}', space=sflag, size = 0x8, scoped, tag = 'scoped memory for tpu_custom_call.1']
    #allocation5 [shape = 'u8[16384]{0}', space=vmem, size = 0x4000, scoped, tag = 'output window, operand 0']
    %6 = vsyncpa [#allocation3], 0
    %s7 = scalar_lea.sflag [#allocation3], 1
    %8 = vsyncpa %s7, 0
    %9 = vsyncpa [#allocation4], 0
    %s10 = scalar_lea.sflag [#allocation4], 1
    %11 = vsyncpa %s10, 0
    loop: start=0, step=1, limit=4
    $region2: #{tpu_custom_call.1} parent=1 // loop_pre_header
      _
    $region3: #{tpu_custom_call.1} parent=1 // loop_header
      %s13 = sphi 0, %s17
      %p14 = scmp.ge.s32.totalorder %s13, 4
      %s20 = sphi 0, %s39
      %s21 = sphi 0, %s35
      %s22 = sphi 0, %s31
      %s23 = sphi 0, %s20
      %s24 = sphi 0, %s21
      %s25 = sphi 0, %s22
      %s26 = sphi 0, %s23
      %s27 = sphi 0, %s24
      %s28 = sphi 0, %s25
      %s46 = sphi 0, %s48
      %s49 = sphi 0, %s46
      %s50 = sphi 0, %s49
      %s66 = sphi 0, %s50
      %s76 = sphi 0, %s78
      %s79 = sphi 0, %s76
      %s80 = sphi 0, %s79
      %s96 = sphi 0, %s80
    $region4: #{tpu_custom_call.1} parent=1 // loop_header_branch
      %16 = sbr.rel (%p14) target = $region8
    $region5: #{tpu_custom_call.1} parent=1 // loop_body
      %s18 = ssub.s32 %s13, 1
      %s19 = ssub.s32 %s13, 2
      %s29 = sadd.s32 1, %s22
      %p30 = scmp.ge.s32.totalorder %s29, 1
      %s31 = scalar_select %p30, 0, %s29
      %s32 = sadd.s32 1, %s21
      %s33 = scalar_select %p30, %s32, %s21
      %p34 = scmp.ge.s32.totalorder %s33, 1
      %s35 = scalar_select %p34, 0, %s33
      %s36 = sadd.s32 1, %s20
      %s37 = scalar_select %p34, %s36, %s20
      %p38 = scmp.ge.s32.totalorder %s37, 2
      %s39 = scalar_select %p38, 0, %s37
      %s40 = ssub.s32 %s20, %s39
      %s41 = ssub.s32 %s21, %s35
      %s42 = sor.u32 %s40, %s41
      %s43 = ssub.s32 %s22, %s31
      %s44 = sor.u32 %s42, %s43
      %p45 = scmp.eq.s32.totalorder %s44, 0
      %s47 = sadd.s32 %s46, 1
      %s48 = scalar_select %p45, %s46, %s47
      %p51 = pneg %p45
      %p52 = scmp.eq.s32.totalorder %s13, 1
      %p53 = por %p51, %p52
      %p54 = scmp.ne.s32.totalorder %s46, %s49
      %p55 = scmp.eq.s32.totalorder %s13, 0
      %p56 = por %p54, %p55
      %p57 = scmp.ne.s32.totalorder %s46, %s49
      %p58 = scmp.eq.s32.totalorder %s18, 1
      %p59 = por %p57, %p58
      %p60 = scmp.ne.s32.totalorder %s49, %s50
      %p61 = scmp.eq.s32.totalorder %s18, 0
      %p62 = por %p60, %p61
      %p63 = scmp.ne.s32.totalorder %s49, %s50
      %p64 = scmp.eq.s32.totalorder %s19, 1
      %p65 = por %p63, %p64
      %p67 = scmp.ne.s32.totalorder %s50, %s66
      %p68 = scmp.eq.s32.totalorder %s19, 0
      %p69 = por %p67, %p68
      %s70 = ssub.s32 %s20, %s39
      %s71 = ssub.s32 %s21, %s35
      %s72 = sor.u32 %s70, %s71
      %s73 = ssub.s32 %s22, %s31
      %s74 = sor.u32 %s72, %s73
      %p75 = scmp.eq.s32.totalorder %s74, 0
      %s77 = sadd.s32 %s76, 1
      %s78 = scalar_select %p75, %s76, %s77
      %p81 = pneg %p75
      %p82 = scmp.eq.s32.totalorder %s13, 1
      %p83 = por %p81, %p82
      %p84 = scmp.ne.s32.totalorder %s76, %s79
      %p85 = scmp.eq.s32.totalorder %s13, 0
      %p86 = por %p84, %p85
      %p87 = scmp.ne.s32.totalorder %s76, %s79
      %p88 = scmp.eq.s32.totalorder %s18, 1
      %p89 = por %p87, %p88
      %p90 = scmp.ne.s32.totalorder %s79, %s80
      %p91 = scmp.eq.s32.totalorder %s18, 0
      %p92 = por %p90, %p91
      %p93 = scmp.ne.s32.totalorder %s79, %s80
      %p94 = scmp.eq.s32.totalorder %s19, 1
      %p95 = por %p93, %p94
      %p97 = scmp.ne.s32.totalorder %s80, %s96
      %p98 = scmp.eq.s32.totalorder %s19, 0
      %p99 = por %p97, %p98
      %p100 = scmp.le.s32.totalorder 1, %s13
      %p101 = scmp.lt.s32.totalorder %s13, 3
      %p102 = pnand %p100, %p101
      %p103 = pneg %p102
      // Predicated region
      $region9: #{tpu_custom_call.1} parent=5 // pred_check
        _
      $region10: #{tpu_custom_call.1} parent=5 // pred_check_branch
        %105 = sbr.rel (%p102) target = $region12
      $region11: #{tpu_custom_call.1} parent=5 // pred_region
        %s106 = ssub.s32 %s13, 1
      $region12: #{tpu_custom_call.1} parent=5 // pred_fallthru
        _
      %p107 = scmp.lt.s32.totalorder %s13, 2
      // Predicated region
      $region13: #{tpu_custom_call.1} parent=5 // pred_check
        %p108 = pneg %p107
      $region14: #{tpu_custom_call.1} parent=5 // pred_check_branch
        %110 = sbr.rel (%p108) target = $region16
      $region15: #{tpu_custom_call.1} parent=5 // pred_region
        // Predicated region
        $region17: #{tpu_custom_call.1} parent=15 // pred_check
          %p111 = pneg %p56
        $region18: #{tpu_custom_call.1} parent=15 // pred_check_branch
          %113 = sbr.rel (%p111) target = $region20
        $region19: #{tpu_custom_call.1} parent=15 // pred_region
          %s114 = sand.u32 %s46, 1
          %s115 = scalar_lea.sflag [#allocation3], %s114
          %s116 = sand.u32 %s46, 1
          %s117 = smul.addr %s116, 192
          %s118 = scalar_lea.vmem [#allocation2], %s117
          %s119 = smul.u32 2, %s21
          %121 = vsyncadd %s115, 0
          %s122 = sadd.s32 %s22, %s119
          %s123 = smul.addr %s20, 24
          %s124 = sadd.s32 %s122, %s123
          %s125 = smul.addr %s124, 8
          %s126 = scalar_lea.hbm %s0, %s125
          %s127 = sshll.u32 %s126, 4
          %s128 = int_to_ptr.hbm [resolvable:$true] %s127
          %s129 = sshll.u32 %s118, 4
          %s130 = int_to_ptr.vmem [resolvable:$true] %s129
          %135 = dma.hbm_to_vmem [thread:$0]  %s128, 3072, %s130, %s115, 128, 128, 8
        $region20: #{tpu_custom_call.1} parent=15 // pred_fallthru
          _
      $region16: #{tpu_custom_call.1} parent=5 // pred_fallthru
        _
      %p136 = scmp.le.s32.totalorder 1, %s13
      %p137 = scmp.lt.s32.totalorder %s13, 3
      %p138 = pnand %p136, %p137
      %p139 = pneg %p138
      // Predicated region
      $region21: #{tpu_custom_call.1} parent=5 // pred_check
        _
      $region22: #{tpu_custom_call.1} parent=5 // pred_check_branch
        %141 = sbr.rel (%p138) target = $region24
      $region23: #{tpu_custom_call.1} parent=5 // pred_region
        %s142 = ssub.s32 %s13, 1
        %s143 = sand.u32 %s49, 1
        %s144 = scalar_lea.sflag [#allocation3], %s143
        %s145 = sand.u32 %s49, 1
        %s146 = smul.addr %s145, 192
        %s147 = scalar_lea.vmem [#allocation2], %s146
        // Predicated region
        $region25: #{tpu_custom_call.1} parent=23 // pred_check
          %p148 = pneg %p62
        $region26: #{tpu_custom_call.1} parent=23 // pred_check_branch
          %150 = sbr.rel (%p148) target = $region28
        $region27: #{tpu_custom_call.1} parent=23 // pred_region
          %152 = dma.done %s144, 3072
        $region28: #{tpu_custom_call.1} parent=23 // pred_fallthru
          _
        %s153 = sand.u32 %s49, 1
        %s154 = scalar_lea.sflag [#allocation3], %s153
        %s155 = sand.u32 %s49, 1
        %s156 = smul.addr %s155, 192
        %s157 = scalar_lea.vmem [#allocation2], %s156
        %p158 = pneg %p62
        %p159 = pneg %p59
        %p160 = pneg %p92
        %p161 = pneg %p89
        %s162 = sand.u32 %s79, 1
        %s163 = scalar_lea.sflag [#allocation4], %s162
        %s164 = sand.u32 %s79, 1
        %s165 = smul.addr %s164, 16
        %s166 = scalar_lea.vmem [#allocation5], %s165
        %s167 = smul.u32 2, %s24
        %s168 = smul.u32 2, %s24
        %v169 = vld [vmem:[%s147] sm:$0xff]
        %v170 = vld [vmem:[%s147 + $0x8] sm:$0xff]
        %v171 = vld [vmem:[%s147 + $0x10] sm:$0xff]
        %v172 = vld [vmem:[%s147 + $0x18] sm:$0xff]
        %v173 = vld [vmem:[%s147 + $0x20] sm:$0xff]
        %v174 = vld [vmem:[%s147 + $0x28] sm:$0xff]
        %v175 = vld [vmem:[%s147 + $0x30] sm:$0xff]
        %v176 = vld [vmem:[%s147 + $0x38] sm:$0xff]
        %v177 = vld [vmem:[%s147 + $0x40] sm:$0xff]
        %v178 = vld [vmem:[%s147 + $0x48] sm:$0xff]
        %v179 = vld [vmem:[%s147 + $0x50] sm:$0xff]
        %v180 = vld [vmem:[%s147 + $0x58] sm:$0xff]
        %v181 = vld [vmem:[%s147 + $0x60] sm:$0xff]
        %v182 = vld [vmem:[%s147 + $0x68] sm:$0xff]
        %v183 = vld [vmem:[%s147 + $0x70] sm:$0xff]
        %v184 = vld [vmem:[%s147 + $0x78] sm:$0xff]
        %v185 = vld [vmem:[%s147 + $0x80] sm:$0xff]
        %v186 = vld [vmem:[%s147 + $0x88] sm:$0xff]
        %v187 = vld [vmem:[%s147 + $0x90] sm:$0xff]
        %v188 = vld [vmem:[%s147 + $0x98] sm:$0xff]
        %v189 = vld [vmem:[%s147 + $0xa0] sm:$0xff]
        %v190 = vld [vmem:[%s147 + $0xa8] sm:$0xff]
        %v191 = vld [vmem:[%s147 + $0xb0] sm:$0xff]
        %v192 = vld [vmem:[%s147 + $0xb8] sm:$0xff]
        %v193 = vcvt.s32.f32 0
        %v194 = vcvt.s32.f32 1
        %v195 = vcvt.s32.f32 2
        %v196 = vcvt.s32.f32 3
        %v197 = vcvt.s32.f32 4
        %v198 = vcvt.s32.f32 5
        %v199 = vcvt.s32.f32 6
        %v200 = vcvt.s32.f32 7
        %v201 = vcvt.s32.f32 8
        %v202 = vcvt.s32.f32 9
        %v203 = vcvt.s32.f32 10
        %v204 = vcvt.s32.f32 11
        %v205 = vmul.f32 %v193, 0.33333334
        %v206 = vmul.f32 %v194, 0.33333334
        %v207 = vmul.f32 %v195, 0.33333334
        %v208 = vmul.f32 %v196, 0.33333334
        %v209 = vmul.f32 %v197, 0.33333334
        %v210 = vmul.f32 %v198, 0.33333334
        %v211 = vmul.f32 %v199, 0.33333334
        %v212 = vmul.f32 %v200, 0.33333334
        %v213 = vmul.f32 %v201, 0.33333334
        %v214 = vmul.f32 %v202, 0.33333334
        %v215 = vmul.f32 %v203, 0.33333334
        %v216 = vmul.f32 %v204, 0.33333334
        %v217 = vmul.f32 %v169, %v205
        %v218 = vmul.f32 %v170, %v205
        %v219 = vmul.f32 %v171, %v206
        %v220 = vmul.f32 %v172, %v206
        %v221 = vmul.f32 %v173, %v207
        %v222 = vmul.f32 %v174, %v207
        %v223 = vmul.f32 %v175, %v208
        %v224 = vmul.f32 %v176, %v208
        %v225 = vmul.f32 %v177, %v209
        %v226 = vmul.f32 %v178, %v209
        %v227 = vmul.f32 %v179, %v210
        %v228 = vmul.f32 %v180, %v210
        %v229 = vmul.f32 %v181, %v211
        %v230 = vmul.f32 %v182, %v211
        %v231 = vmul.f32 %v183, %v212
        %v232 = vmul.f32 %v184, %v212
        %v233 = vmul.f32 %v185, %v213
        %v234 = vmul.f32 %v186, %v213
        %v235 = vmul.f32 %v187, %v214
        %v236 = vmul.f32 %v188, %v214
        %v237 = vmul.f32 %v189, %v215
        %v238 = vmul.f32 %v190, %v215
        %v239 = vmul.f32 %v191, %v216
        %v240 = vmul.f32 %v192, %v216
        %vm241 = vcmask 130048
        %v242 = vsel %vm241, %v217, 0.0
        %v243 = vsel %vm241, %v219, 0.0
        %v244 = vadd.f32 %v242, %v243
        %v245 = vsel %vm241, %v221, 0.0
        %v246 = vadd.f32 %v244, %v245
        %v247 = vsel %vm241, %v223, 0.0
        %v248 = vadd.f32 %v246, %v247
        %v249 = vsel %vm241, %v225, 0.0
        %v250 = vadd.f32 %v248, %v249
        %v251 = vsel %vm241, %v227, 0.0
        %v252 = vadd.f32 %v250, %v251
        %v253 = vsel %vm241, %v229, 0.0
        %v254 = vadd.f32 %v252, %v253
        %v255 = vsel %vm241, %v231, 0.0
        %v256 = vadd.f32 %v254, %v255
        %v257 = vsel %vm241, %v233, 0.0
        %v258 = vadd.f32 %v256, %v257
        %v259 = vsel %vm241, %v235, 0.0
        %v260 = vadd.f32 %v258, %v259
        %v261 = vsel %vm241, %v237, 0.0
        %v262 = vadd.f32 %v260, %v261
        %v263 = vsel %vm241, %v239, 0.0
        %v264 = vadd.f32 %v262, %v263
        %v265 = vsel %vm241, %v218, 0.0
        %v266 = vsel %vm241, %v220, 0.0
        %v267 = vadd.f32 %v265, %v266
        %v268 = vsel %vm241, %v222, 0.0
        %v269 = vadd.f32 %v267, %v268
        %v270 = vsel %vm241, %v224, 0.0
        %v271 = vadd.f32 %v269, %v270
        %v272 = vsel %vm241, %v226, 0.0
        %v273 = vadd.f32 %v271, %v272
        %v274 = vsel %vm241, %v228, 0.0
        %v275 = vadd.f32 %v273, %v274
        %v276 = vsel %vm241, %v230, 0.0
        %v277 = vadd.f32 %v275, %v276
        %v278 = vsel %vm241, %v232, 0.0
        %v279 = vadd.f32 %v277, %v278
        %v280 = vsel %vm241, %v234, 0.0
        %v281 = vadd.f32 %v279, %v280
        %v282 = vsel %vm241, %v236, 0.0
        %v283 = vadd.f32 %v281, %v282
        %v284 = vsel %vm241, %v238, 0.0
        %v285 = vadd.f32 %v283, %v284
        %v286 = vsel %vm241, %v240, 0.0
        %v287 = vadd.f32 %v285, %v286
        %288 = vst.msk [vmem:[%s166] sm:$0xff] %vm241, %v264
        %289 = vst.msk [vmem:[%s166 + $0x8] sm:$0xff] %vm241, %v287
        %s290 = sand.u32 %s79, 1
        %s291 = scalar_lea.sflag [#allocation4], %s290
        %s292 = sand.u32 %s79, 1
        %s293 = smul.addr %s292, 16
        %s294 = scalar_lea.vmem [#allocation5], %s293
        // Predicated region
        $region29: #{tpu_custom_call.1} parent=23 // pred_check
          %p295 = pneg %p89
        $region30: #{tpu_custom_call.1} parent=23 // pred_check_branch
          %297 = sbr.rel (%p295) target = $region32
        $region31: #{tpu_custom_call.1} parent=23 // pred_region
          %s298 = smul.u32 2, %s24
          %300 = vsyncadd %s291, 0
          %s301 = sadd.s32 %s25, %s298
          %s302 = smul.addr %s23, 2
          %s303 = sadd.s32 %s301, %s302
          %s304 = smul.addr %s303, 8
          %s305 = scalar_lea.hbm %s1, %s304
          %s306 = sshll.u32 %s294, 4
          %s307 = int_to_ptr.vmem [resolvable:$true] %s306
          %s308 = sshll.u32 %s305, 4
          %s309 = int_to_ptr.hbm [resolvable:$true] %s308
          %314 = dma.vmem_to_hbm [thread:$0]  %s307, 256, %s309, %s291, 128, 128, 8
        $region32: #{tpu_custom_call.1} parent=23 // pred_fallthru
          _
      $region24: #{tpu_custom_call.1} parent=5 // pred_fallthru
        _
      %p315 = scmp.le.s32.totalorder 2, %s13
      // Predicated region
      $region33: #{tpu_custom_call.1} parent=5 // pred_check
        %p316 = pneg %p315
      $region34: #{tpu_custom_call.1} parent=5 // pred_check_branch
        %318 = sbr.rel (%p316) target = $region36
      $region35: #{tpu_custom_call.1} parent=5 // pred_region
        %s319 = ssub.s32 %s13, 2
        // Predicated region
        $region37: #{tpu_custom_call.1} parent=35 // pred_check
          %p320 = pneg %p95
        $region38: #{tpu_custom_call.1} parent=35 // pred_check_branch
          %322 = sbr.rel (%p320) target = $region40
        $region39: #{tpu_custom_call.1} parent=35 // pred_region
          %s323 = sand.u32 %s80, 1
          %s324 = scalar_lea.sflag [#allocation4], %s323
          %s325 = sand.u32 %s80, 1
          %s326 = smul.addr %s325, 16
          %s327 = scalar_lea.vmem [#allocation5], %s326
          %329 = dma.done %s324, 256
        $region40: #{tpu_custom_call.1} parent=35 // pred_fallthru
          _
      $region36: #{tpu_custom_call.1} parent=5 // pred_fallthru
        _
    $region6: #{tpu_custom_call.1} parent=1 // loop_footer
      %s17 = sadd.s32 1, %s13
    $region7: #{tpu_custom_call.1} parent=1 // loop_footer_branch
      %12 = sbr.rel target = $region3
    $region8: #{tpu_custom_call.1} parent=1 // loop_exit
      _
    %330 = vsyncpa [#allocation3], 1
    %s331 = scalar_lea.sflag [#allocation3], 1
    %332 = vsyncpa %s331, 1
    %333 = vsyncpa [#allocation4], 1
    %s334 = scalar_lea.sflag [#allocation4], 1
    %335 = vsyncpa %s334, 1

</llo_original>
